<compile_context>
chip_gen: v7x
topology: tpu7x:2x2x1
jax: 0.10.0
libtpu: 0.0.40
codegen_flags: <defaults>
</compile_context>

<pallas_src>
import functools

import jax
import jax.numpy as jnp
from jax import lax
from jax.experimental import pallas as pl
from jax.experimental.pallas import tpu as pltpu


def _round_up(n, m):
    return ((n + m - 1) // m) * m


def _stream_layer_kernel_head1(x_ref, w1_ref, b1_ref, w2_ref, b2_ref, o_ref,
                               *, compute_dtype):
    """D_out == 1: lane-dense [1, tb] output row per batch tile."""
    # Layer 1: [tb, D_in] @ [D_in, H] on the MXU, f32 accumulation.
    x = x_ref[...].astype(compute_dtype)
    h = jnp.dot(x, w1_ref[...], preferred_element_type=jnp.float32)
    h = jnp.maximum(h + b1_ref[...], 0.0)                       # bias + ReLU (VPU)

    # Layer 2: contract H of w2 [1, H] against H of h [tb, H]  ->  [1, tb].
    # Same contraction pattern as q @ k.T; keeps the result dense on lanes so
    # the writeback is a dense DMA (no 1-lane masked stores, no tb/8 one-lane
    # vreg intermediate).
    y = lax.dot_general(w2_ref[...], h.astype(compute_dtype),
                        (((1,), (1,)), ((), ())),
                        preferred_element_type=jnp.float32)     # [1, tb]
    y = jnp.maximum(y + b2_ref[...], 0.0)                       # b2 is [1,1], lane-broadcast
    o_ref[...] = y.astype(o_ref.dtype)


def _stream_layer_kernel_general(x_ref, w1_ref, b1_ref, w2t_ref, b2_ref, o_ref,
                                 *, compute_dtype):
    """General D_out: two clean MXU matmuls (w2 pre-transposed to [H, D_out])."""
    x = x_ref[...].astype(compute_dtype)
    h = jnp.dot(x, w1_ref[...], preferred_element_type=jnp.float32)
    h = jnp.maximum(h + b1_ref[...], 0.0)
    y = jnp.dot(h.astype(compute_dtype), w2t_ref[...],
                preferred_element_type=jnp.float32)             # [tb, D_out]
    y = jnp.maximum(y + b2_ref[...], 0.0)
    o_ref[...] = y.astype(o_ref.dtype)


def stream_layer(x, w1, b1, w2, b2, *, block_b=8192,
                 compute_dtype=jnp.float32, core_parallel=False):
    """Forward pass of StreamLayer.

    x:  [B, D_in]  float32
    w1: [D_in, H]        (transposed from PyTorch's [H, D_in])
    b1: [1, H]
    w2: [D_out, H]       (PyTorch layout [out_features, in_features])
    b2: [1, D_out]
    block_b:       batch tile (rows per grid step).  8192 fits all generations'
                   scoped-VMEM defaults (incl. v5e 16 MiB / v7x 32 MiB); going
                   above ~16384 on v7x/v5e needs vmem_limit_bytes headroom.
    compute_dtype: opt-in bf16 MXU inputs (f32 accumulation); default f32
                   exactly matches the PyTorch module's numerics.
    core_parallel: opt-in pltpu.CORE_PARALLEL batch split across the two
                   TensorCores on v7x (leave False on single-TC v5e/v6e).
    returns: [B, D_out] float32
    """
    B, D_in = x.shape
    H = w1.shape[1]
    D_out = w2.shape[0]

    # Tile selection: single tile covering the whole (possibly tiny / ragged)
    # batch when it fits, otherwise a 128-aligned tile so the lane-dense output
    # block and the x sublane dim satisfy the (8,128) layout rules when grid>1.
    tb = min(block_b, B)
    if tb < B:
        tb = _round_up(tb, 128)
    if tb >= B:
        tb, grid_b = B, 1
    else:
        grid_b = pl.cdiv(B, tb)      # ragged last x block handled by Pallas; no jnp.pad

    w1c = w1.astype(compute_dtype)
    dimsem = (pltpu.CORE_PARALLEL,) if core_parallel else ("parallel",)
    cparams = pltpu.CompilerParams(dimension_semantics=dimsem)

    # Streamed x tile; weights/biases resident (constant index_map).
    # TODO(synk): if a profile still shows exposed DMA for very large B on v7x,
    # deepen this spec with pipeline_mode=pl.Buffered(3).
    x_spec = pl.BlockSpec((tb, D_in), lambda i: (i, 0))
    w1_spec = pl.BlockSpec((D_in, H), lambda i: (0, 0))
    b1_spec = pl.BlockSpec((1, H), lambda i: (0, 0))

    if D_out == 1:
        # Lane-dense head: flat (1, grid_b*tb) output slab, one (1, tb) row per tile.
        w2c = w2.astype(compute_dtype)                  # [1, H], torch layout, lane-dense
        out = pl.pallas_call(
            functools.partial(_stream_layer_kernel_head1, compute_dtype=compute_dtype),
            out_shape=jax.ShapeDtypeStruct((1, grid_b * tb), jnp.float32),
            grid_spec=pltpu.PrefetchScalarGridSpec(
                num_scalar_prefetch=0,
                grid=(grid_b,),
                in_specs=[
                    x_spec,
                    w1_spec,
                    b1_spec,
                    pl.BlockSpec((1, H), lambda i: (0, 0)),     # w2 [1, H]
                    pl.BlockSpec((1, 1), lambda i: (0, 0)),     # b2 [1, 1]
                ],
                out_specs=pl.BlockSpec((1, tb), lambda i: (0, i)),
            ),
            compiler_params=cparams,
        )(x, w1c, b1, w2c, b2)
        # Back to the module's (B, 1) layout; tile-padding rows sliced off.
        return out.reshape(-1)[:B].reshape(B, 1)

    # General D_out: one-time host-side transpose -> clean [tb,H]@[H,D_out] matmul.
    w2t = jnp.transpose(w2).astype(compute_dtype)       # [H, D_out]
    out = pl.pallas_call(
        functools.partial(_stream_layer_kernel_general, compute_dtype=compute_dtype),
        out_shape=jax.ShapeDtypeStruct((grid_b * tb, D_out), jnp.float32),
        grid_spec=pltpu.PrefetchScalarGridSpec(
            num_scalar_prefetch=0,
            grid=(grid_b,),
            in_specs=[
                x_spec,
                w1_spec,
                b1_spec,
                pl.BlockSpec((H, D_out), lambda i: (0, 0)),
                pl.BlockSpec((1, D_out), lambda i: (0, 0)),
            ],
            out_specs=pl.BlockSpec((tb, D_out), lambda i: (i, 0)),
        ),
        compiler_params=cparams,
    )(x, w1c, b1, w2t, b2)
    return out[:B]


def init_params(key, input_dimension=128, hidden=128, output_dimension=1):
    """PyTorch-style Linear init: U(-1/sqrt(fan_in), 1/sqrt(fan_in))."""
    k1, k2, k3, k4 = jax.random.split(key, 4)
    bound1 = 1.0 / jnp.sqrt(jnp.float32(input_dimension))
    bound2 = 1.0 / jnp.sqrt(jnp.float32(hidden))
    w1 = jax.random.uniform(k1, (input_dimension, hidden), jnp.float32, -bound1, bound1)
    b1 = jax.random.uniform(k2, (1, hidden), jnp.float32, -bound1, bound1)
    # w2 kept in PyTorch's native [out_features, in_features] layout.
    w2 = jax.random.uniform(k3, (output_dimension, hidden), jnp.float32, -bound2, bound2)
    b2 = jax.random.uniform(k4, (1, output_dimension), jnp.float32, -bound2, bound2)
    return w1, b1, w2, b2


def _reference(x, w1, b1, w2, b2):
    h = jnp.maximum(x @ w1 + b1, 0.0)
    return jnp.maximum(h @ w2.T + b2, 0.0)


if __name__ == "__main__":
    key = jax.random.PRNGKey(0)
    kx1, kx2, kx3, kp1, kp2 = jax.random.split(key, 5)

    D_in, H = 128, 128

    # Case 1: D_out == 1, small batch -> single tile, lane-dense head path.
    w1, b1, w2, b2 = init_params(kp1, D_in, H, 1)
    B1 = 16
    x1 = jax.random.normal(kx1, (B1, D_in), jnp.float32)
    out1 = jax.block_until_ready(stream_layer(x1, w1, b1, w2, b2))
    ref1 = _reference(x1, w1, b1, w2, b2)
    assert out1.shape == (B1, 1)
    assert jnp.allclose(out1, ref1, atol=1e-4, rtol=1e-4)

    # Case 2: D_out == 1, batch not divisible by the tile -> 3 grid steps with a
    # ragged last x block (no full-array pad) and a multi-tile lane-dense output.
    B2 = 300
    x2 = jax.random.normal(kx2, (B2, D_in), jnp.float32)
    out2 = jax.block_until_ready(stream_layer(x2, w1, b1, w2, b2, block_b=128))
    ref2 = _reference(x2, w1, b1, w2, b2)
    assert out2.shape == (B2, 1)
    assert jnp.allclose(out2, ref2, atol=1e-4, rtol=1e-4)

    # Case 3: D_out > 1 fallback (pre-transposed w2, plain MXU matmul).
    w1b, b1b, w2b, b2b = init_params(kp2, D_in, H, 4)
    B3 = 16
    x3 = jax.random.normal(kx3, (B3, D_in), jnp.float32)
    out3 = jax.block_until_ready(stream_layer(x3, w1b, b1b, w2b, b2b))
    ref3 = _reference(x3, w1b, b1b, w2b, b2b)
    assert out3.shape == (B3, 4)
    assert jnp.allclose(out3, ref3, atol=1e-4, rtol=1e-4)

    print("KERNEL_OK")
</pallas_src>

<mosaic_0001>
module attributes {stable_mosaic.version = 11 : i64} {
  func.func @_stream_layer_kernel_head1(%arg0: i32, %arg1: memref<16x128xf32, #tpu.memory_space<vmem>>, %arg2: memref<128x128xf32, #tpu.memory_space<vmem>>, %arg3: memref<1x128xf32, #tpu.memory_space<vmem>>, %arg4: memref<1x128xf32, #tpu.memory_space<vmem>>, %arg5: memref<1x1xf32, #tpu.memory_space<vmem>>, %arg6: memref<1x16xf32, #tpu.memory_space<vmem>>) attributes {dimension_semantics = [#tpu.dimension_semantics<parallel>], iteration_bounds = array<i64: 1>, scalar_prefetch = 0 : i64, scratch_operands = 0 : i64, tpu.core_type = #tpu.core_type<tc>, window_params = [{transform_indices = @transform_0, window_bounds = array<i64: 16, 128>}, {pipeline_mode = #tpu.pipeline_mode<synchronous>, transform_indices = @transform_1, window_bounds = array<i64: 128, 128>}, {pipeline_mode = #tpu.pipeline_mode<synchronous>, transform_indices = @transform_2, window_bounds = array<i64: 1, 128>}, {pipeline_mode = #tpu.pipeline_mode<synchronous>, transform_indices = @transform_3, window_bounds = array<i64: 1, 128>}, {pipeline_mode = #tpu.pipeline_mode<synchronous>, transform_indices = @transform_4, window_bounds = array<i64: 1, 1>}, {transform_indices = @transform_5, window_bounds = array<i64: 1, 16>}]} {
    %c0 = arith.constant 0 : index
    %c0_0 = arith.constant 0 : index
    %0 = vector.load %arg1[%c0, %c0_0] : memref<16x128xf32, #tpu.memory_space<vmem>>, vector<16x128xf32>
    %c0_1 = arith.constant 0 : index
    %c0_2 = arith.constant 0 : index
    %1 = vector.load %arg2[%c0_1, %c0_2] : memref<128x128xf32, #tpu.memory_space<vmem>>, vector<128x128xf32>
    %cst = arith.constant dense<0.000000e+00> : vector<16x128xf32>
    %2 = tpu.matmul %0, %1, %cst {dimension_numbers = #tpu.dot_dimension_numbers<[1], [0], [0], [1], [0, 0, 1, 1], [], []>} : vector<16x128xf32>, vector<128x128xf32>, vector<16x128xf32> -> vector<16x128xf32>
    %c0_3 = arith.constant 0 : index
    %c0_4 = arith.constant 0 : index
    %3 = vector.load %arg3[%c0_3, %c0_4] : memref<1x128xf32, #tpu.memory_space<vmem>>, vector<1x128xf32>
    %4 = vector.broadcast %3 : vector<1x128xf32> to vector<16x128xf32>
    %5 = arith.addf %2, %4 : vector<16x128xf32>
    %cst_5 = arith.constant 0.000000e+00 : f32
    %6 = vector.broadcast %cst_5 : f32 to vector<16x128xf32>
    %7 = arith.maximumf %5, %6 : vector<16x128xf32>
    %c0_6 = arith.constant 0 : index
    %c0_7 = arith.constant 0 : index
    %8 = vector.load %arg4[%c0_6, %c0_7] : memref<1x128xf32, #tpu.memory_space<vmem>>, vector<1x128xf32>
    %cst_8 = arith.constant dense<0.000000e+00> : vector<1x16xf32>
    %9 = tpu.matmul %8, %7, %cst_8 {dimension_numbers = #tpu.dot_dimension_numbers<[1], [1], [0], [0], [0, 0, 1, 0], [], []>} : vector<1x128xf32>, vector<16x128xf32>, vector<1x16xf32> -> vector<1x16xf32>
    %c0_9 = arith.constant 0 : index
    %c0_10 = arith.constant 0 : index
    %10 = vector.load %arg5[%c0_9, %c0_10] : memref<1x1xf32, #tpu.memory_space<vmem>>, vector<1x1xf32>
    %11 = vector.broadcast %10 : vector<1x1xf32> to vector<1x16xf32>
    %12 = arith.addf %9, %11 : vector<1x16xf32>
    %cst_11 = arith.constant 0.000000e+00 : f32
    %13 = vector.broadcast %cst_11 : f32 to vector<1x16xf32>
    %14 = arith.maximumf %12, %13 : vector<1x16xf32>
    %c0_12 = arith.constant 0 : index
    %c0_13 = arith.constant 0 : index
    %15 = vector.load %arg6[%c0_12, %c0_13] : memref<1x16xf32, #tpu.memory_space<vmem>>, vector<1x16xf32>
    tpu.vector_store %arg6[%c0_12, %c0_13], %14 {strides = array<i32>} : memref<1x16xf32, #tpu.memory_space<vmem>>, vector<1x16xf32>,
    return
  }
  func.func @transform_0(%arg0: i32) -> (i32, i32) {
    %c0_i32 = arith.constant 0 : i32
    %c0_i32_0 = arith.constant 0 : i32
    return %arg0, %c0_i32 : i32, i32
  }
  func.func @transform_1(%arg0: i32) -> (i32, i32) {
    %c0_i32 = arith.constant 0 : i32
    %c0_i32_0 = arith.constant 0 : i32
    %c0_i32_1 = arith.constant 0 : i32
    return %c0_i32, %c0_i32_0 : i32, i32
  }
  func.func @transform_2(%arg0: i32) -> (i32, i32) {
    %c0_i32 = arith.constant 0 : i32
    %c0_i32_0 = arith.constant 0 : i32
    %c0_i32_1 = arith.constant 0 : i32
    return %c0_i32, %c0_i32_0 : i32, i32
  }
  func.func @transform_3(%arg0: i32) -> (i32, i32) {
    %c0_i32 = arith.constant 0 : i32
    %c0_i32_0 = arith.constant 0 : i32
    %c0_i32_1 = arith.constant 0 : i32
    return %c0_i32, %c0_i32_0 : i32, i32
  }
  func.func @transform_4(%arg0: i32) -> (i32, i32) {
    %c0_i32 = arith.constant 0 : i32
    %c0_i32_0 = arith.constant 0 : i32
    %c0_i32_1 = arith.constant 0 : i32
    return %c0_i32, %c0_i32_0 : i32, i32
  }
  func.func @transform_5(%arg0: i32) -> (i32, i32) {
    %c0_i32 = arith.constant 0 : i32
    %c0_i32_0 = arith.constant 0 : i32
    return %c0_i32, %arg0 : i32, i32
  }
}

</mosaic_0001>

<llo_original>
// kernel: tpu_custom_call.1
$region0: #{tpu_custom_call.1}
  #allocation0 [shape = 'u32[]', space=smem, size = 0x4, offset = 0x4, fixed_abs, tag = 'smem constant byte address 0x4 - core index']
  #allocation1 [shape = 'u32[144,128]{1,0:T(1,128)}', space=vmem, size = 0x12000, scoped, tag = 'internal scratch']
  #allocation2 [shape = 'f32[1,1]{1,0:T(1,128)S(1)}', space=vmem, size = 0x200, scoped, tag = 'scoped memory for tpu_custom_call.1']
  %s0 = inlined_call_operand.hbm [shape: f32[16,128], index: 0, kind: input, shape index: {}]
  %s1 = inlined_call_operand.hbm [shape: f32[128,128], index: 1, kind: input, shape index: {}]
  %s2 = inlined_call_operand.vmem [shape: f32[1,128], index: 2, kind: input, shape index: {}]
  %s3 = inlined_call_operand.vmem [shape: f32[1,128], index: 3, kind: input, shape index: {}]
  %s4 = inlined_call_operand.<no memory space> [shape: f32[1,1], index: 4, kind: input, shape index: {}]
  %s5 = inlined_call_operand.hbm [shape: f32[1,16], index: 5, kind: output, shape index: {}]
  %s6 = sld [smem:[#allocation0]]
  $region38: #{tpu_custom_call.1} parent=0
    _
  %s8 = ssub.s32 1, %s6
  %s9 = scalar_select 0, %s8, %s6
  %v10 = vstv %s4
  %11 = vst [vmem:[#allocation2] sm:$0x1] %v10
  $region1: #{tpu_custom_call.1} parent=0
    #allocation3 [shape = 'u8[8192]{0}', space=vmem, size = 0x2000, scoped, tag = 'input window, operand 0, single buffered']
    #allocation4 [shape = 's32[1]{0}', space=sflag, size = 0x4, scoped, tag = 'scoped memory for tpu_custom_call.1']
    #allocation5 [shape = 's32[1]{0}', space=sflag, size = 0x4, scoped, tag = 'scoped memory for tpu_custom_call.1']
    #allocation6 [shape = 'u8[65536]{0}', space=vmem, size = 0x10000, scoped, tag = 'input window, operand 1, single buffered']
    #allocation7 [shape = 's32[1]{0}', space=sflag, size = 0x4, scoped, tag = 'scoped memory for tpu_custom_call.1']
    #allocation8 [shape = 'u8[512]{0}', space=vmem, size = 0x400, scoped, tag = 'output window, operand 0, single buffered']
    %12 = vsyncpa [#allocation4], 0
    %13 = vsyncpa [#allocation7], 0
    %14 = vsyncpa [#allocation5], 0
    // Predicated region
    $region2: #{tpu_custom_call.1} parent=1 // pred_check
      _
    $region3: #{tpu_custom_call.1} parent=1 // pred_check_branch
      %16 = sbr.rel (0) target = $region5
    $region4: #{tpu_custom_call.1} parent=1 // pred_region
      %s18 = ssub.s32 256, 256
      %19 = vsyncadd [#allocation4], %s18
      %s20 = sshll.u32 [#allocation3], 4
      %s21 = int_to_ptr.vmem [resolvable:$true] %s20
      %26 = dma.hbm_to_vmem [thread:$0]  %s0, 256, %s21, [#allocation4], 128, 128, 8
    $region5: #{tpu_custom_call.1} parent=1 // pred_fallthru
      _
    // Predicated region
    $region6: #{tpu_custom_call.1} parent=1 // pred_check
      _
    $region7: #{tpu_custom_call.1} parent=1 // pred_check_branch
      %28 = sbr.rel (0) target = $region9
    $region8: #{tpu_custom_call.1} parent=1 // pred_region
      %s30 = ssub.s32 2048, 2048
      %31 = vsyncadd [#allocation7], %s30
      %s32 = sshll.u32 [#allocation6], 4
      %s33 = int_to_ptr.vmem [resolvable:$true] %s32
      %38 = dma.hbm_to_vmem [thread:$0]  %s1, 2048, %s33, [#allocation7], 128, 128, 8
    $region9: #{tpu_custom_call.1} parent=1 // pred_fallthru
      _
    // Predicated region
    $region10: #{tpu_custom_call.1} parent=1 // pred_check
      _
    $region11: #{tpu_custom_call.1} parent=1 // pred_check_branch
      %40 = sbr.rel (0) target = $region13
    $region12: #{tpu_custom_call.1} parent=1 // pred_region
      _
    $region13: #{tpu_custom_call.1} parent=1 // pred_fallthru
      _
    // Predicated region
    $region14: #{tpu_custom_call.1} parent=1 // pred_check
      _
    $region15: #{tpu_custom_call.1} parent=1 // pred_check_branch
      %42 = sbr.rel (0) target = $region17
    $region16: #{tpu_custom_call.1} parent=1 // pred_region
      _
    $region17: #{tpu_custom_call.1} parent=1 // pred_fallthru
      _
    // Predicated region
    $region18: #{tpu_custom_call.1} parent=1 // pred_check
      _
    $region19: #{tpu_custom_call.1} parent=1 // pred_check_branch
      %44 = sbr.rel (0) target = $region21
    $region20: #{tpu_custom_call.1} parent=1 // pred_region
      _
    $region21: #{tpu_custom_call.1} parent=1 // pred_fallthru
      _
    // Predicated region
    $region22: #{tpu_custom_call.1} parent=1 // pred_check
      _
    $region23: #{tpu_custom_call.1} parent=1 // pred_check_branch
      %46 = sbr.rel (0) target = $region25
    $region24: #{tpu_custom_call.1} parent=1 // pred_region
      %47 = dma.done [#allocation4], 256
    $region25: #{tpu_custom_call.1} parent=1 // pred_fallthru
      _
    // Predicated region
    $region26: #{tpu_custom_call.1} parent=1 // pred_check
      _
    $region27: #{tpu_custom_call.1} parent=1 // pred_check_branch
      %49 = sbr.rel (0) target = $region29
    $region28: #{tpu_custom_call.1} parent=1 // pred_region
      %50 = dma.done [#allocation7], 2048
    $region29: #{tpu_custom_call.1} parent=1 // pred_fallthru
      _
    %v51 = vld [vmem:[#allocation3] sm:$0xff]
    %v52 = vld [vmem:[#allocation3 + $0x8] sm:$0xff]
    %v53 = vld [vmem:[#allocation6] sm:$0xff]
    %v54 = vld [vmem:[#allocation6 + $0x8] sm:$0xff]
    %v55 = vld [vmem:[#allocation6 + $0x10] sm:$0xff]
    %v56 = vld [vmem:[#allocation6 + $0x18] sm:$0xff]
    %v57 = vld [vmem:[#allocation6 + $0x20] sm:$0xff]
    %v58 = vld [vmem:[#allocation6 + $0x28] sm:$0xff]
    %v59 = vld [vmem:[#allocation6 + $0x30] sm:$0xff]
    %v60 = vld [vmem:[#allocation6 + $0x38] sm:$0xff]
    %v61 = vld [vmem:[#allocation6 + $0x40] sm:$0xff]
    %v62 = vld [vmem:[#allocation6 + $0x48] sm:$0xff]
    %v63 = vld [vmem:[#allocation6 + $0x50] sm:$0xff]
    %v64 = vld [vmem:[#allocation6 + $0x58] sm:$0xff]
    %v65 = vld [vmem:[#allocation6 + $0x60] sm:$0xff]
    %v66 = vld [vmem:[#allocation6 + $0x68] sm:$0xff]
    %v67 = vld [vmem:[#allocation6 + $0x70] sm:$0xff]
    %v68 = vld [vmem:[#allocation6 + $0x78] sm:$0xff]
    %v69 = vld [vmem:[%s2] sm:$0x1]
    %v71 = vlaneseq
    %v72 = vshrl.u32 %v71, 7
    %v73 = vsub.s32 0, %v72
    %v74 = vrot.slane %v69, %v73
    %76 = vmatprep.subr.mxu0 0.0
    %77 = vmatpush1.msra.mxu0 %v53
    %78 = vmatprep.subr.mxu0 0.0
    %79 = vmatpush1.msra.mxu0 %v54
    %80 = vmatprep.subr.mxu0 0.0
    %81 = vmatpush1.msra.mxu0 %v55
    %82 = vmatprep.subr.mxu0 0.0
    %83 = vmatpush1.msra.mxu0 %v56
    %84 = vmatprep.subr.mxu0 0.0
    %85 = vmatpush1.msra.mxu0 %v57
    %86 = vmatprep.subr.mxu0 0.0
    %87 = vmatpush1.msra.mxu0 %v58
    %88 = vmatprep.subr.mxu0 0.0
    %89 = vmatpush1.msra.mxu0 %v59
    %90 = vmatprep.subr.mxu0 0.0
    %91 = vmatpush1.msra.mxu0 %v60
    %92 = vmatprep.subr.mxu0 0.0
    %93 = vmatpush1.msra.mxu0 %v61
    %94 = vmatprep.subr.mxu0 0.0
    %95 = vmatpush1.msra.mxu0 %v62
    %96 = vmatprep.subr.mxu0 0.0
    %97 = vmatpush1.msra.mxu0 %v63
    %98 = vmatprep.subr.mxu0 0.0
    %99 = vmatpush1.msra.mxu0 %v64
    %100 = vmatprep.subr.mxu0 0.0
    %101 = vmatpush1.msra.mxu0 %v65
    %102 = vmatprep.subr.mxu0 0.0
    %103 = vmatpush1.msra.mxu0 %v66
    %104 = vmatprep.subr.mxu0 0.0
    %105 = vmatpush1.msra.mxu0 %v67
    %106 = vmatprep.subr.mxu0 0.0
    %107 = vmatpush1.msra.mxu0 %v68
    %108 = vmatprep.subr.mxu0 0.0
    %109 = vmatpush1.msra.mxu0 0.0
    %110 = vmatprep.subr.mxu0 0.0
    %111 = vmatpush1.msra.mxu0 0.0
    %112 = vmatprep.subr.mxu0 0.0
    %113 = vmatpush1.msra.mxu0 0.0
    %114 = vmatprep.subr.mxu0 0.0
    %115 = vmatpush1.msra.mxu0 0.0
    %116 = vmatprep.subr.mxu0 0.0
    %117 = vmatpush1.msra.mxu0 0.0
    %118 = vmatprep.subr.mxu0 0.0
    %119 = vmatpush1.msra.mxu0 0.0
    %120 = vmatprep.subr.mxu0 0.0
    %121 = vmatpush1.msra.mxu0 0.0
    %122 = vmatprep.subr.mxu0 0.0
    %123 = vmatpush1.msra.mxu0 0.0
    %124 = vmatprep.subr.mxu0 0.0
    %125 = vmatpush1.msra.mxu0 0.0
    %126 = vmatprep.subr.mxu0 0.0
    %127 = vmatpush1.msra.mxu0 0.0
    %128 = vmatprep.subr.mxu0 0.0
    %129 = vmatpush1.msra.mxu0 0.0
    %130 = vmatprep.subr.mxu0 0.0
    %131 = vmatpush1.msra.mxu0 0.0
    %132 = vmatprep.subr.mxu0 0.0
    %133 = vmatpush1.msra.mxu0 0.0
    %134 = vmatprep.subr.mxu0 0.0
    %135 = vmatpush1.msra.mxu0 0.0
    %136 = vmatprep.subr.mxu0 0.0
    %137 = vmatpush1.msra.mxu0 0.0
    %138 = vmatprep.subr.mxu0 0.0
    %139 = vmatpush1.msra.mxu0 0.0
    %140 = vmatprep.mubr.f32.mxu0 0.0
    %141 = vmatmul.mubr.f32.gmra.mrb[0].mxu0 %v51
    %v142 = vpop.f32.mrb[0].mxu0
    %v143 = vadd.f32 %v74, %v142
    %v144 = vpop.f32.mrb[0].mxu0
    %145 = vmatprep.mubr.f32.mxu0 0.0
    %146 = vmatmul.mubr.f32.gmra.mrb[0].mxu0 %v52
    %v147 = vpop.f32.mrb[0].mxu0
    %v148 = vadd.f32 %v74, %v147
    %v149 = vpop.f32.mrb[0].mxu0
    %150 = vdwg.mxu0
    %v151 = vmax.f32 %v143, 0.0
    %v152 = vmax.f32 %v148, 0.0
    %v153 = vld [vmem:[%s3] sm:$0x1]
    %v154 = vld [vmem:[#allocation2] sm:$0x1]
    %156 = vset.pattern.permute.xlu0 0
    %157 = vperm.xlu0 %156, %v154
    %v158 = vpop.permute.xlu0 %157
    %v160 = vlaneseq
    %v161 = vshrl.u32 %v160, 7
    %v162 = vsub.s32 0, %v161
    %v163 = vrot.slane %v158, %v162
    %164 = vmatprep.subr.mxu0 0.0
    %165 = vmatpush1.xpose.msra.mxu0 %v151
    %166 = vmatprep.subr.mxu0 0.0
    %167 = vmatpush1.xpose.msra.mxu0 %v152
    %168 = vmatprep.subr.mxu0 0.0
    %169 = vmatpush1.xpose.msra.mxu0 0.0
    %170 = vmatprep.subr.mxu0 0.0
    %171 = vmatpush1.xpose.msra.mxu0 0.0
    %172 = vmatprep.subr.mxu0 0.0
    %173 = vmatpush1.xpose.msra.mxu0 0.0
    %174 = vmatprep.subr.mxu0 0.0
    %175 = vmatpush1.xpose.msra.mxu0 0.0
    %176 = vmatprep.subr.mxu0 0.0
    %177 = vmatpush1.xpose.msra.mxu0 0.0
    %178 = vmatprep.subr.mxu0 0.0
    %179 = vmatpush1.xpose.msra.mxu0 0.0
    %180 = vmatprep.subr.mxu0 0.0
    %181 = vmatpush1.xpose.msra.mxu0 0.0
    %182 = vmatprep.subr.mxu0 0.0
    %183 = vmatpush1.xpose.msra.mxu0 0.0
    %184 = vmatprep.subr.mxu0 0.0
    %185 = vmatpush1.xpose.msra.mxu0 0.0
    %186 = vmatprep.subr.mxu0 0.0
    %187 = vmatpush1.xpose.msra.mxu0 0.0
    %188 = vmatprep.subr.mxu0 0.0
    %189 = vmatpush1.xpose.msra.mxu0 0.0
    %190 = vmatprep.subr.mxu0 0.0
    %191 = vmatpush1.xpose.msra.mxu0 0.0
    %192 = vmatprep.subr.mxu0 0.0
    %193 = vmatpush1.xpose.msra.mxu0 0.0
    %194 = vmatprep.subr.mxu0 0.0
    %195 = vmatpush1.xpose.msra.mxu0 0.0
    %196 = vmatprep.subr.mxu0 0.0
    %197 = vmatpush1.xpose.msra.mxu0 0.0
    %198 = vmatprep.subr.mxu0 0.0
    %199 = vmatpush1.xpose.msra.mxu0 0.0
    %200 = vmatprep.subr.mxu0 0.0
    %201 = vmatpush1.xpose.msra.mxu0 0.0
    %202 = vmatprep.subr.mxu0 0.0
    %203 = vmatpush1.xpose.msra.mxu0 0.0
    %204 = vmatprep.subr.mxu0 0.0
    %205 = vmatpush1.xpose.msra.mxu0 0.0
    %206 = vmatprep.subr.mxu0 0.0
    %207 = vmatpush1.xpose.msra.mxu0 0.0
    %208 = vmatprep.subr.mxu0 0.0
    %209 = vmatpush1.xpose.msra.mxu0 0.0
    %210 = vmatprep.subr.mxu0 0.0
    %211 = vmatpush1.xpose.msra.mxu0 0.0
    %212 = vmatprep.subr.mxu0 0.0
    %213 = vmatpush1.xpose.msra.mxu0 0.0
    %214 = vmatprep.subr.mxu0 0.0
    %215 = vmatpush1.xpose.msra.mxu0 0.0
    %216 = vmatprep.subr.mxu0 0.0
    %217 = vmatpush1.xpose.msra.mxu0 0.0
    %218 = vmatprep.subr.mxu0 0.0
    %219 = vmatpush1.xpose.msra.mxu0 0.0
    %220 = vmatprep.subr.mxu0 0.0
    %221 = vmatpush1.xpose.msra.mxu0 0.0
    %222 = vmatprep.subr.mxu0 0.0
    %223 = vmatpush1.xpose.msra.mxu0 0.0
    %224 = vmatprep.subr.mxu0 0.0
    %225 = vmatpush1.xpose.msra.mxu0 0.0
    %226 = vmatprep.subr.mxu0 0.0
    %227 = vmatpush1.xpose.msra.mxu0 0.0
    %228 = vmatprep.mubr.f32.mxu0 0.0
    %229 = vmatmul.mubr.f32.gmra.mrb[0].mxu0 %v153
    %v230 = vpop.f32.mrb[0].mxu0
    %v231 = vadd.f32 %v163, %v230
    %v232 = vpop.f32.mrb[0].mxu0
    %233 = vdwg.mxu0
    %v234 = vmax.f32 %v231, 0.0
    %vm235 = vcmask 122880
    %236 = vst.msk [vmem:[#allocation8] sm:$0x1] %vm235, %v234
    // Predicated region
    $region30: #{tpu_custom_call.1} parent=1 // pred_check
      _
    $region31: #{tpu_custom_call.1} parent=1 // pred_check_branch
      %238 = sbr.rel (0) target = $region33
    $region32: #{tpu_custom_call.1} parent=1 // pred_region
      %s240 = ssub.s32 16, 16
      %241 = vsyncadd [#allocation5], %s240
      %s243 = sshll.u32 [#allocation8], 4
      %s244 = int_to_ptr.vmem [resolvable:$true] %s243
      %246 = dma.vmem_to_hbm [thread:$0]  %s244, 16, %s5, [#allocation5]
    $region33: #{tpu_custom_call.1} parent=1 // pred_fallthru
      _
    // Predicated region
    $region34: #{tpu_custom_call.1} parent=1 // pred_check
      _
    $region35: #{tpu_custom_call.1} parent=1 // pred_check_branch
      %248 = sbr.rel (0) target = $region37
    $region36: #{tpu_custom_call.1} parent=1 // pred_region
      %249 = dma.done [#allocation5], 16
    $region37: #{tpu_custom_call.1} parent=1 // pred_fallthru
      _
    %250 = vsyncpa [#allocation4], 1
    %251 = vsyncpa [#allocation7], 1
    %252 = vsyncpa [#allocation5], 1

</llo_original>
